<compile_context>
chip_gen: v6e
topology: v6e:2x2x1
jax: 0.10.0
libtpu: 0.0.40
codegen_flags: <defaults>
</compile_context>

<pallas_src>
import functools
import jax
import jax.numpy as jnp
from jax.experimental import pallas as pl
from jax.experimental.pallas import tpu as pltpu


# ----------------------------------------------------------------------------
# Pallas kernel: one destination type, all relations fused by concatenation.
#   out[Nd_pad, Fp] = relu?( A_cat @ XW_cat + b_sum )
# grid = (Nd_pad // tm, K_pad // tk); reduction axis (k) last.
# ----------------------------------------------------------------------------
def _rgcn_dst_kernel(a_ref, xw_ref, b_ref, o_ref, acc_ref, *, apply_relu):
    k = pl.program_id(1)

    # (tm, tk) @ (tk, Fp) in bf16 with f32 accumulation on the MXU.
    prod = jnp.dot(a_ref[...], xw_ref[...], preferred_element_type=jnp.float32)

    @pl.when(k == 0)
    def _():
        acc_ref[...] = prod          # direct write: saves a zero-init pass

    @pl.when(k > 0)
    def _():
        acc_ref[...] += prod

    @pl.when(k == pl.num_programs(1) - 1)
    def _():
        y = acc_ref[...] + b_ref[...]          # bias summed over relations
        if apply_relu:
            y = jnp.maximum(y, 0.0)
        o_ref[...] = y.astype(o_ref.dtype)


def hetero_conv_dst(a_cat, xw_cat, b_sum, *, apply_relu, tm, tk, out_dtype):
    """out = relu?(A_cat @ XW_cat + b_sum) for one destination type.

    a_cat:  [Nd_pad, K_pad]  bf16 concatenated normalized adjacencies
    xw_cat: [K_pad,  Fp]     bf16 concatenated pre-multiplied features X_r @ W_r
    b_sum:  [1, Fp]          f32 sum of per-relation biases
    returns [Nd_pad, Fp]     out_dtype
    """
    nd_pad, k_pad = a_cat.shape
    fp = xw_cat.shape[1]
    a_bytes = jnp.dtype(a_cat.dtype).itemsize
    xw_bytes = jnp.dtype(xw_cat.dtype).itemsize
    out_bytes = jnp.dtype(out_dtype).itemsize
    n_i = nd_pad // tm

    # Advisory cost so XLA overlaps neighboring wrapper ops with this call.
    cost = pl.CostEstimate(
        flops=2 * nd_pad * k_pad * fp,
        transcendentals=0,
        bytes_accessed=(nd_pad * k_pad * a_bytes          # A read once
                        + n_i * k_pad * fp * xw_bytes     # XW re-read per i-tile
                        + nd_pad * fp * out_bytes))       # output written once

    # Double-buffered A / XW / out + f32 accumulator + bias, with headroom.
    # Stays ~20-25 MiB at the default (2048, 2048) tiles -> fits v7x's 64 MiB
    # physical VMEM; the explicit limit mainly lifts v5e's 16 MiB scoped default.
    vmem_need = (2 * tm * tk * a_bytes + 2 * tk * fp * xw_bytes
                 + 2 * tm * fp * out_bytes + tm * fp * 4 + 2 * fp * 4)
    vmem_limit = min(max(int(vmem_need * 1.3) + (2 << 20), 32 << 20), 96 << 20)

    kernel = functools.partial(_rgcn_dst_kernel, apply_relu=apply_relu)
    return pl.pallas_call(
        kernel,
        out_shape=jax.ShapeDtypeStruct((nd_pad, fp), out_dtype),
        grid_spec=pltpu.PrefetchScalarGridSpec(
            num_scalar_prefetch=0,
            grid=(nd_pad // tm, k_pad // tk),
            in_specs=[
                pl.BlockSpec((tm, tk), lambda i, k: (i, k)),
                pl.BlockSpec((tk, fp), lambda i, k: (k, 0)),
                pl.BlockSpec((1, fp), lambda i, k: (0, 0)),
            ],
            out_specs=pl.BlockSpec((tm, fp), lambda i, k: (i, 0)),
            scratch_shapes=[pltpu.VMEM((tm, fp), jnp.float32)],
        ),
        compiler_params=pltpu.CompilerParams(
            dimension_semantics=("parallel", "arbitrary"),
            vmem_limit_bytes=vmem_limit),
        cost_estimate=cost,
    )(a_cat, xw_cat, b_sum)


# ----------------------------------------------------------------------------
# Glue: padding / tiling helpers, one-time graph prep, layer driver, forward
# ----------------------------------------------------------------------------
def _cdiv(a, b):
    return -(-a // b)


def _round_up(n, m):
    return _cdiv(n, m) * m


def _tile_and_pad(n, target, unit, min_blocks=1):
    """Balanced tile size (multiple of `unit`) and padded extent.

    Splits n into ceil(n/target) (>= min_blocks) roughly equal tiles, so an
    extent just above the target no longer pads to ~2x.
    """
    n = max(n, unit)
    n_blocks = max(min_blocks, _cdiv(n, target))
    tile = _round_up(_cdiv(n, n_blocks), unit)
    return tile, tile * n_blocks


def _pad2d(x, rows, cols):
    return jnp.pad(x, ((0, rows - x.shape[0]), (0, cols - x.shape[1])))


def normalized_adj(key, n_src, n_dst, p=0.35):
    """Dense A_hat[dst, src] with DGL GraphConv norm='both'."""
    adj = (jax.random.uniform(key, (n_dst, n_src)) < p).astype(jnp.float32)
    deg_out = jnp.maximum(adj.sum(axis=0), 1.0)   # out-degree of each src
    deg_in = jnp.maximum(adj.sum(axis=1), 1.0)    # in-degree of each dst
    return adj * (deg_in[:, None] ** -0.5) * (deg_out[None, :] ** -0.5)


def prepare_graph(adjs, rel_triples, n_nodes, *, compute_dtype=jnp.bfloat16,
                  tm_target=2048, tk_target=2048):
    """One-time, per-dst-type prep shared by all layers (A is layer-invariant).

    Concatenates each dst type's relation adjacencies along the source axis,
    pads to the chosen (tm, tk) tiling and casts to the compute dtype.
    """
    prep = {}
    for dst in sorted({d for (_, _, d) in rel_triples}):
        rels = [(s, r) for (s, r, d) in rel_triples if d == dst]
        nd = n_nodes[dst]
        k_total = sum(n_nodes[s] for (s, _) in rels)
        # Keep >= 2 dst-tiles on sizeable graphs so v7x megacore has work.
        tm, nd_pad = _tile_and_pad(nd, tm_target, 16,
                                   min_blocks=2 if nd >= 32 else 1)
        tk, k_pad = _tile_and_pad(k_total, tk_target, 128)
        a_cat = jnp.concatenate([adjs[r] for (_, r) in rels], axis=1)
        a_cat = _pad2d(a_cat, nd_pad, k_pad).astype(compute_dtype)
        prep[dst] = dict(rels=rels, nd=nd, k_pad=k_pad, tm=tm, tk=tk,
                         a_cat=a_cat)
    return prep


def rgcn_layer(prep, feats, weights, biases, *, apply_relu, out_dtype,
               compute_dtype=jnp.bfloat16):
    """One HeteroGraphConv layer (aggregate='sum') via the Pallas kernel."""
    out = {}
    for dst, p in prep.items():
        fout = weights[p["rels"][0][1]].shape[1]
        fp = _round_up(fout, 128)                      # lane-dense output

        xw_list = []
        b_sum = jnp.zeros((fp,), jnp.float32)
        for (s, r) in p["rels"]:
            # Reassociated small matmul X @ W (wrapper / XLA side); the Pallas
            # kernel only does the big A @ (XW) contraction.
            xw = jnp.dot(feats[s].astype(compute_dtype),
                         weights[r].astype(compute_dtype),
                         preferred_element_type=jnp.float32)
            xw_list.append(xw)
            b_sum = b_sum.at[:fout].add(biases[r].astype(jnp.float32))

        xw_cat = jnp.concatenate(xw_list, axis=0)
        xw_cat = _pad2d(xw_cat, p["k_pad"], fp).astype(compute_dtype)

        y = hetero_conv_dst(p["a_cat"], xw_cat, b_sum[None, :],
                            apply_relu=apply_relu, tm=p["tm"], tk=p["tk"],
                            out_dtype=out_dtype)
        # Padded dst rows carry b_sum -> keep this slice.
        out[dst] = y[:p["nd"], :fout]
    return out


def rgcn_forward(adjs, inputs, params, rel_triples, n_nodes):
    # dropout (p=0 / eval) -> identity.
    prep = prepare_graph(adjs, rel_triples, n_nodes)       # hoisted A prep (1x)
    h = rgcn_layer(prep, inputs, params["w1"], params["b1"],
                   apply_relu=True, out_dtype=jnp.bfloat16)
    h = rgcn_layer(prep, h, params["w2"], params["b2"],
                   apply_relu=True, out_dtype=jnp.bfloat16)
    h = rgcn_layer(prep, h, params["w3"], params["b3"],
                   apply_relu=False, out_dtype=jnp.float32)
    return h


# Pure-jnp f32 reference (same math, no Pallas / no bf16).
def _ref_layer(adjs, feats, weights, biases, rel_triples, apply_relu):
    out = {}
    for (s, r, d) in rel_triples:
        y = adjs[r] @ feats[s] @ weights[r] + biases[r]
        out[d] = out.get(d, 0.0) + y
    if apply_relu:
        out = {k: jnp.maximum(v, 0.0) for k, v in out.items()}
    return out


def _ref_forward(adjs, inputs, params, rel_triples):
    h = _ref_layer(adjs, inputs, params["w1"], params["b1"], rel_triples, True)
    h = _ref_layer(adjs, h, params["w2"], params["b2"], rel_triples, True)
    h = _ref_layer(adjs, h, params["w3"], params["b3"], rel_triples, False)
    return h


if __name__ == "__main__":
    key = jax.random.PRNGKey(0)

    # Heterogeneous graph: 2 node types, 3 canonical relations (src, rel, dst).
    rel_triples = [
        ("user", "follows", "user"),
        ("user", "rates", "item"),
        ("item", "rated_by", "user"),
    ]
    n_nodes = {"user": 16, "item": 8}
    in_feats = {"user": 16, "item": 8}
    hid_feats, out_feats = 32, 8

    keys = jax.random.split(key, 32)
    kit = iter(keys)

    # Normalized adjacencies per relation (A_hat[dst, src]).
    adjs = {
        r: normalized_adj(next(kit), n_nodes[s], n_nodes[d])
        for (s, r, d) in rel_triples
    }

    # Node input features.
    inputs = {
        nt: jax.random.normal(next(kit), (n_nodes[nt], in_feats[nt]),
                              dtype=jnp.float32)
        for nt in sorted(n_nodes)
    }

    # Deterministic parameters: per-layer, per-relation GraphConv weight+bias.
    def mk_w(k, fin, fout):
        return 0.5 * jax.random.normal(k, (fin, fout), dtype=jnp.float32)

    params = {
        "w1": {r: mk_w(next(kit), in_feats[s], hid_feats)
               for (s, r, _) in rel_triples},
        "b1": {r: jnp.zeros((hid_feats,), jnp.float32)
               for (_, r, _) in rel_triples},
        "w2": {r: mk_w(next(kit), hid_feats, hid_feats)
               for (_, r, _) in rel_triples},
        "b2": {r: jnp.zeros((hid_feats,), jnp.float32)
               for (_, r, _) in rel_triples},
        "w3": {r: mk_w(next(kit), hid_feats, out_feats)
               for (_, r, _) in rel_triples},
        "b3": {r: jnp.zeros((out_feats,), jnp.float32)
               for (_, r, _) in rel_triples},
    }

    out = rgcn_forward(adjs, inputs, params, rel_triples, n_nodes)
    out = jax.tree_util.tree_map(jax.block_until_ready, out)

    ref = _ref_forward(adjs, inputs, params, rel_triples)
    for nt in out:
        assert out[nt].shape == (n_nodes[nt], out_feats)
        # bf16 inputs / hidden activations with f32 accumulation -> loose tol.
        assert jnp.allclose(out[nt].astype(jnp.float32), ref[nt],
                            atol=5e-2, rtol=5e-2), nt

    print("KERNEL_OK")
</pallas_src>

<mosaic_0001>
module attributes {stable_mosaic.version = 11 : i64} {
  func.func @_rgcn_dst_kernel(%arg0: i32, %arg1: i32, %arg2: memref<16x128xbf16, #tpu.memory_space<vmem>>, %arg3: memref<128x128xbf16, #tpu.memory_space<vmem>>, %arg4: memref<1x128xf32, #tpu.memory_space<vmem>>, %arg5: memref<16x128xbf16, #tpu.memory_space<vmem>>, %arg6: memref<16x128xf32, #tpu.memory_space<vmem>>) attributes {dimension_semantics = [#tpu.dimension_semantics<parallel>, #tpu.dimension_semantics<arbitrary>], iteration_bounds = array<i64: 1, 1>, scalar_prefetch = 0 : i64, scratch_operands = 1 : i64, tpu.core_type = #tpu.core_type<tc>, window_params = [{transform_indices = @transform_0, window_bounds = array<i64: 16, 128>}, {transform_indices = @transform_1, window_bounds = array<i64: 128, 128>}, {pipeline_mode = #tpu.pipeline_mode<synchronous>, transform_indices = @transform_2, window_bounds = array<i64: 1, 128>}, {transform_indices = @transform_3, window_bounds = array<i64: 16, 128>}]} {
    %c0 = arith.constant 0 : index
    %c0_0 = arith.constant 0 : index
    %0 = vector.load %arg2[%c0, %c0_0] : memref<16x128xbf16, #tpu.memory_space<vmem>>, vector<16x128xbf16>
    %c0_1 = arith.constant 0 : index
    %c0_2 = arith.constant 0 : index
    %1 = vector.load %arg3[%c0_1, %c0_2] : memref<128x128xbf16, #tpu.memory_space<vmem>>, vector<128x128xbf16>
    %cst = arith.constant dense<0.000000e+00> : vector<16x128xf32>
    %2 = tpu.matmul %0, %1, %cst {dimension_numbers = #tpu.dot_dimension_numbers<[1], [0], [0], [1], [0, 0, 1, 1], [], []>} : vector<16x128xbf16>, vector<128x128xbf16>, vector<16x128xf32> -> vector<16x128xf32>
    %c0_i32 = arith.constant 0 : i32
    %3 = arith.cmpi eq, %arg1, %c0_i32 : i32
    %4 = arith.extui %3 : i1 to i32
    %c0_i32_3 = arith.constant 0 : i32
    %5 = arith.cmpi ne, %4, %c0_i32_3 : i32
    scf.if %5 {
      %c0_8 = arith.constant 0 : index
      %c0_9 = arith.constant 0 : index
      %12 = vector.load %arg6[%c0_8, %c0_9] : memref<16x128xf32, #tpu.memory_space<vmem>>, vector<16x128xf32>
      tpu.vector_store %arg6[%c0_8, %c0_9], %2 {strides = array<i32>} : memref<16x128xf32, #tpu.memory_space<vmem>>, vector<16x128xf32>,
    } else {
    }
    %c0_i32_4 = arith.constant 0 : i32
    %6 = arith.cmpi sgt, %arg1, %c0_i32_4 : i32
    %7 = arith.extui %6 : i1 to i32
    %c0_i32_5 = arith.constant 0 : i32
    %8 = arith.cmpi ne, %7, %c0_i32_5 : i32
    scf.if %8 {
      %c0_8 = arith.constant 0 : index
      %c0_9 = arith.constant 0 : index
      %12 = vector.load %arg6[%c0_8, %c0_9] : memref<16x128xf32, #tpu.memory_space<vmem>>, vector<16x128xf32>
      %13 = arith.addf %12, %2 : vector<16x128xf32>
      %c0_10 = arith.constant 0 : index
      %c0_11 = arith.constant 0 : index
      %14 = vector.load %arg6[%c0_10, %c0_11] : memref<16x128xf32, #tpu.memory_space<vmem>>, vector<16x128xf32>
      tpu.vector_store %arg6[%c0_10, %c0_11], %13 {strides = array<i32>} : memref<16x128xf32, #tpu.memory_space<vmem>>, vector<16x128xf32>,
    } else {
    }
    %c0_i32_6 = arith.constant 0 : i32
    %9 = arith.cmpi eq, %arg1, %c0_i32_6 : i32
    %10 = arith.extui %9 : i1 to i32
    %c0_i32_7 = arith.constant 0 : i32
    %11 = arith.cmpi ne, %10, %c0_i32_7 : i32
    scf.if %11 {
      %c0_8 = arith.constant 0 : index
      %c0_9 = arith.constant 0 : index
      %12 = vector.load %arg6[%c0_8, %c0_9] : memref<16x128xf32, #tpu.memory_space<vmem>>, vector<16x128xf32>
      %c0_10 = arith.constant 0 : index
      %c0_11 = arith.constant 0 : index
      %13 = vector.load %arg4[%c0_10, %c0_11] : memref<1x128xf32, #tpu.memory_space<vmem>>, vector<1x128xf32>
      %14 = vector.broadcast %13 : vector<1x128xf32> to vector<16x128xf32>
      %15 = arith.addf %12, %14 : vector<16x128xf32>
      %cst_12 = arith.constant 0.000000e+00 : f32
      %16 = vector.broadcast %cst_12 : f32 to vector<16x128xf32>
      %17 = arith.maximumf %15, %16 : vector<16x128xf32>
      %18 = arith.truncf %17 : vector<16x128xf32> to vector<16x128xbf16>
      %c0_13 = arith.constant 0 : index
      %c0_14 = arith.constant 0 : index
      %19 = vector.load %arg5[%c0_13, %c0_14] : memref<16x128xbf16, #tpu.memory_space<vmem>>, vector<16x128xbf16>
      tpu.vector_store %arg5[%c0_13, %c0_14], %18 {strides = array<i32>} : memref<16x128xbf16, #tpu.memory_space<vmem>>, vector<16x128xbf16>,
    } else {
    }
    return
  }
  func.func @transform_0(%arg0: i32, %arg1: i32) -> (i32, i32) {
    %c0_i32 = arith.constant 0 : i32
    return %arg0, %arg1 : i32, i32
  }
  func.func @transform_1(%arg0: i32, %arg1: i32) -> (i32, i32) {
    %c0_i32 = arith.constant 0 : i32
    %c0_i32_0 = arith.constant 0 : i32
    return %arg1, %c0_i32 : i32, i32
  }
  func.func @transform_2(%arg0: i32, %arg1: i32) -> (i32, i32) {
    %c0_i32 = arith.constant 0 : i32
    %c0_i32_0 = arith.constant 0 : i32
    %c0_i32_1 = arith.constant 0 : i32
    return %c0_i32, %c0_i32_0 : i32, i32
  }
  func.func @transform_3(%arg0: i32, %arg1: i32) -> (i32, i32) {
    %c0_i32 = arith.constant 0 : i32
    %c0_i32_0 = arith.constant 0 : i32
    return %arg0, %c0_i32 : i32, i32
  }
}

</mosaic_0001>

<llo_original>
// kernel: tpu_custom_call.1
$region0: #{tpu_custom_call.1}
  #allocation0 [shape = 'u32[]', space=smem, size = 0x4, offset = 0x4, fixed_abs, tag = 'smem constant byte address 0x4 - core index']
  #allocation1 [shape = 'u32[144,128]{1,0:T(1,128)}', space=vmem, size = 0x12000, scoped, tag = 'internal scratch']
  #allocation2 [shape = 'f32[16,128]{1,0:T(8,128)}', space=vmem, size = 0x2000, scoped, tag = 'scratch operand']
  %s0 = inlined_call_operand.hbm [shape: bf16[16,128], index: 0, kind: input, shape index: {}]
  %s1 = inlined_call_operand.hbm [shape: bf16[128,128], index: 1, kind: input, shape index: {}]
  %s2 = inlined_call_operand.vmem [shape: f32[1,128], index: 2, kind: input, shape index: {}]
  %s3 = inlined_call_operand.hbm [shape: bf16[16,128], index: 3, kind: output, shape index: {}]
  %s4 = sld [smem:[#allocation0]]
  $region42: #{tpu_custom_call.1} parent=0
    _
  %s6 = ssub.s32 1, %s4
  %s7 = scalar_select 0, %s6, %s4
  $region1: #{tpu_custom_call.1} parent=0
    #allocation3 [shape = 'u8[4096]{0}', space=vmem, size = 0x1000, scoped, tag = 'input window, operand 0, single buffered']
    #allocation4 [shape = 's32[1]{0}', space=sflag, size = 0x4, scoped, tag = 'scoped memory for tpu_custom_call.1']
    #allocation5 [shape = 's32[1]{0}', space=sflag, size = 0x4, scoped, tag = 'scoped memory for tpu_custom_call.1']
    #allocation6 [shape = 'u8[32768]{0}', space=vmem, size = 0x8000, scoped, tag = 'input window, operand 1, single buffered']
    #allocation7 [shape = 's32[1]{0}', space=sflag, size = 0x4, scoped, tag = 'scoped memory for tpu_custom_call.1']
    #allocation8 [shape = 'u8[4096]{0}', space=vmem, size = 0x1000, scoped, tag = 'output window, operand 0, single buffered']
    %8 = vsyncpa [#allocation4], 0
    %9 = vsyncpa [#allocation7], 0
    %10 = vsyncpa [#allocation5], 0
    // Predicated region
    $region2: #{tpu_custom_call.1} parent=1 // pred_check
      _
    $region3: #{tpu_custom_call.1} parent=1 // pred_check_branch
      %12 = sbr.rel (0) target = $region5
    $region4: #{tpu_custom_call.1} parent=1 // pred_region
      %s14 = ssub.s32 128, 128
      %15 = vsyncadd [#allocation4], %s14
      %s16 = sshll.u32 [#allocation3], 4
      %s17 = int_to_ptr.vmem [resolvable:$true] %s16
      %22 = dma.hbm_to_vmem [thread:$0]  %s0, 128, %s17, [#allocation4], 64, 64, 4
    $region5: #{tpu_custom_call.1} parent=1 // pred_fallthru
      _
    // Predicated region
    $region6: #{tpu_custom_call.1} parent=1 // pred_check
      _
    $region7: #{tpu_custom_call.1} parent=1 // pred_check_branch
      %24 = sbr.rel (0) target = $region9
    $region8: #{tpu_custom_call.1} parent=1 // pred_region
      %s26 = ssub.s32 1024, 1024
      %27 = vsyncadd [#allocation7], %s26
      %s28 = sshll.u32 [#allocation6], 4
      %s29 = int_to_ptr.vmem [resolvable:$true] %s28
      %34 = dma.hbm_to_vmem [thread:$0]  %s1, 1024, %s29, [#allocation7], 64, 64, 4
    $region9: #{tpu_custom_call.1} parent=1 // pred_fallthru
      _
    // Predicated region
    $region10: #{tpu_custom_call.1} parent=1 // pred_check
      _
    $region11: #{tpu_custom_call.1} parent=1 // pred_check_branch
      %36 = sbr.rel (0) target = $region13
    $region12: #{tpu_custom_call.1} parent=1 // pred_region
      _
    $region13: #{tpu_custom_call.1} parent=1 // pred_fallthru
      _
    // Predicated region
    $region14: #{tpu_custom_call.1} parent=1 // pred_check
      _
    $region15: #{tpu_custom_call.1} parent=1 // pred_check_branch
      %38 = sbr.rel (0) target = $region17
    $region16: #{tpu_custom_call.1} parent=1 // pred_region
      %39 = dma.done [#allocation4], 128
    $region17: #{tpu_custom_call.1} parent=1 // pred_fallthru
      _
    // Predicated region
    $region18: #{tpu_custom_call.1} parent=1 // pred_check
      _
    $region19: #{tpu_custom_call.1} parent=1 // pred_check_branch
      %41 = sbr.rel (0) target = $region21
    $region20: #{tpu_custom_call.1} parent=1 // pred_region
      %42 = dma.done [#allocation7], 1024
    $region21: #{tpu_custom_call.1} parent=1 // pred_fallthru
      _
    %v44 = vld [vmem:[#allocation3] sm:$0xf]
    %v45 = vld [vmem:[#allocation3 + $0x4] sm:$0xf]
    %v46 = vld [vmem:[#allocation6] sm:$0xf]
    %v47 = vld [vmem:[#allocation6 + $0x4] sm:$0xf]
    %v48 = vld [vmem:[#allocation6 + $0x8] sm:$0xf]
    %v49 = vld [vmem:[#allocation6 + $0xc] sm:$0xf]
    %v50 = vld [vmem:[#allocation6 + $0x10] sm:$0xf]
    %v51 = vld [vmem:[#allocation6 + $0x14] sm:$0xf]
    %v52 = vld [vmem:[#allocation6 + $0x18] sm:$0xf]
    %v53 = vld [vmem:[#allocation6 + $0x1c] sm:$0xf]
    %v54 = vld [vmem:[#allocation6 + $0x20] sm:$0xf]
    %v55 = vld [vmem:[#allocation6 + $0x24] sm:$0xf]
    %v56 = vld [vmem:[#allocation6 + $0x28] sm:$0xf]
    %v57 = vld [vmem:[#allocation6 + $0x2c] sm:$0xf]
    %v58 = vld [vmem:[#allocation6 + $0x30] sm:$0xf]
    %v59 = vld [vmem:[#allocation6 + $0x34] sm:$0xf]
    %v60 = vld [vmem:[#allocation6 + $0x38] sm:$0xf]
    %v61 = vld [vmem:[#allocation6 + $0x3c] sm:$0xf]
    %v64 = vunpack.c.l.b16 %v44
    %v65 = vunpack.c.l.b16 %v45
    %v66 = vpack.c.b16 %v65, %v64
    %v84 = vunpack.c.l.b16 %v46
    %v85 = vunpack.c.l.b16 %v47
    %v86 = vunpack.c.l.b16 %v48
    %v87 = vunpack.c.l.b16 %v49
    %v88 = vunpack.c.l.b16 %v50
    %v89 = vunpack.c.l.b16 %v51
    %v90 = vunpack.c.l.b16 %v52
    %v91 = vunpack.c.l.b16 %v53
    %v92 = vunpack.c.l.b16 %v54
    %v93 = vunpack.c.l.b16 %v55
    %v94 = vunpack.c.l.b16 %v56
    %v95 = vunpack.c.l.b16 %v57
    %v96 = vunpack.c.l.b16 %v58
    %v97 = vunpack.c.l.b16 %v59
    %v98 = vunpack.c.l.b16 %v60
    %v99 = vunpack.c.l.b16 %v61
    %v100 = vpack.c.b16 %v85, %v84
    %v101 = vpack.c.b16 %v87, %v86
    %v102 = vpack.c.b16 %v89, %v88
    %v103 = vpack.c.b16 %v91, %v90
    %v104 = vpack.c.b16 %v93, %v92
    %v105 = vpack.c.b16 %v95, %v94
    %v106 = vpack.c.b16 %v97, %v96
    %v107 = vpack.c.b16 %v99, %v98
    %116 = vmatprep.subr.bf16.mxu0 0
    %117 = vmatpush1.bf16.msra.mxu0 %v107
    %118 = vmatprep.subr.bf16.mxu0 0
    %119 = vmatpush1.bf16.msra.mxu0 %v106
    %120 = vmatprep.subr.bf16.mxu0 0
    %121 = vmatpush1.bf16.msra.mxu0 %v105
    %122 = vmatprep.subr.bf16.mxu0 0
    %123 = vmatpush1.bf16.msra.mxu0 %v104
    %124 = vmatprep.subr.bf16.mxu0 0
    %125 = vmatpush1.bf16.msra.mxu0 %v103
    %126 = vmatprep.subr.bf16.mxu0 0
    %127 = vmatpush1.bf16.msra.mxu0 %v102
    %128 = vmatprep.subr.bf16.mxu0 0
    %129 = vmatpush1.bf16.msra.mxu0 %v101
    %130 = vmatprep.subr.bf16.mxu0 0
    %131 = vmatpush1.bf16.msra.mxu0 %v100
    %132 = vmatprep.subr.bf16.mxu0 0
    %133 = vmatpush2.bf16.msra.mxu0 0
    %134 = vmatprep.subr.bf16.mxu0 0
    %135 = vmatpush2.bf16.msra.mxu0 0
    %136 = vmatprep.subr.bf16.mxu0 0
    %137 = vmatpush2.bf16.msra.mxu0 0
    %138 = vmatprep.subr.bf16.mxu0 0
    %139 = vmatpush2.bf16.msra.mxu0 0
    %140 = vmatprep.subr.bf16.mxu0 0
    %141 = vmatpush2.bf16.msra.mxu0 0
    %142 = vmatprep.subr.bf16.mxu0 0
    %143 = vmatpush2.bf16.msra.mxu0 0
    %144 = vmatprep.subr.bf16.mxu0 0
    %145 = vmatpush2.bf16.msra.mxu0 0
    %146 = vmatprep.subr.bf16.mxu0 0
    %147 = vmatpush2.bf16.msra.mxu0 0
    %148 = vmatprep.mubr.bf16.mxu0 0
    %149 = vmatmul.mubr.bf16.gmra.mxu0 %v66
    %v150 = vpop.f32.mrf.mxu0
    %v151 = vadd.f32 0.0, %v150
    %v152 = vpop.f32.mrf.mxu0
    %v153 = vpop.f32.mrf.mxu0
    %v154 = vadd.f32 0.0, %v153
    %v155 = vpop.f32.mrf.mxu0
    %156 = vdwg.mxu0
    %p157 = scmp.eq.s32.totalorder 0, 0
    // Predicated region
    $region22: #{tpu_custom_call.1} parent=1 // pred_check
      %p158 = pneg %p157
    $region23: #{tpu_custom_call.1} parent=1 // pred_check_branch
      %160 = sbr.rel (%p158) target = $region25
    $region24: #{tpu_custom_call.1} parent=1 // pred_region
      %161 = vst [vmem:[#allocation2] sm:$0xff] %v151
      %162 = vst [vmem:[#allocation2 + $0x8] sm:$0xff] %v154
    $region25: #{tpu_custom_call.1} parent=1 // pred_fallthru
      _
    %p163 = scmp.gt.s32.totalorder 0, 0
    // Predicated region
    $region26: #{tpu_custom_call.1} parent=1 // pred_check
      %p164 = pneg %p163
    $region27: #{tpu_custom_call.1} parent=1 // pred_check_branch
      %166 = sbr.rel (%p164) target = $region29
    $region28: #{tpu_custom_call.1} parent=1 // pred_region
      %v167 = vld [vmem:[#allocation2] sm:$0xff]
      %v168 = vld [vmem:[#allocation2 + $0x8] sm:$0xff]
      %v169 = vadd.f32 %v167, %v151
      %v170 = vadd.f32 %v168, %v154
      %171 = vst [vmem:[#allocation2] sm:$0xff] %v169
      %172 = vst [vmem:[#allocation2 + $0x8] sm:$0xff] %v170
    $region29: #{tpu_custom_call.1} parent=1 // pred_fallthru
      _
    // Predicated region
    $region30: #{tpu_custom_call.1} parent=1 // pred_check
      %p173 = pneg %p157
    $region31: #{tpu_custom_call.1} parent=1 // pred_check_branch
      %175 = sbr.rel (%p173) target = $region33
    $region32: #{tpu_custom_call.1} parent=1 // pred_region
      %v176 = vld [vmem:[#allocation2] sm:$0xff]
      %v177 = vld [vmem:[#allocation2 + $0x8] sm:$0xff]
      %v178 = vld [vmem:[%s2] sm:$0x1]
      %v180 = vlaneseq
      %v181 = vshrl.u32 %v180, 7
      %v182 = vsub.s32 0, %v181
      %v183 = vrot.slane %v178, %v182
      %v185 = vadd.f32 %v176, %v183
      %v186 = vadd.f32 %v177, %v183
      %v187 = vmax.f32 %v185, 0.0
      %v188 = vmax.f32 %v186, 0.0
      %v189 = vpack.c.bf16 %v188, %v187
      %v191 = vunpack.c.l.b16 %v189
      %v192 = vunpack.c.h.b16 %v189
      %v193 = vpack.c.b16 %v191, %v191
      %v194 = vpack.c.b16 %v192, %v192
      %197 = vst [vmem:[#allocation8] sm:$0xf] %v193
      %198 = vst [vmem:[#allocation8 + $0x4] sm:$0xf] %v194
    $region33: #{tpu_custom_call.1} parent=1 // pred_fallthru
      _
    // Predicated region
    $region34: #{tpu_custom_call.1} parent=1 // pred_check
      _
    $region35: #{tpu_custom_call.1} parent=1 // pred_check_branch
      %200 = sbr.rel (0) target = $region37
    $region36: #{tpu_custom_call.1} parent=1 // pred_region
      %s202 = ssub.s32 128, 128
      %203 = vsyncadd [#allocation5], %s202
      %s204 = sshll.u32 [#allocation8], 4
      %s205 = int_to_ptr.vmem [resolvable:$true] %s204
      %210 = dma.vmem_to_hbm [thread:$0]  %s205, 128, %s3, [#allocation5], 64, 64, 4
    $region37: #{tpu_custom_call.1} parent=1 // pred_fallthru
      _
    // Predicated region
    $region38: #{tpu_custom_call.1} parent=1 // pred_check
      _
    $region39: #{tpu_custom_call.1} parent=1 // pred_check_branch
      %212 = sbr.rel (0) target = $region41
    $region40: #{tpu_custom_call.1} parent=1 // pred_region
      %213 = dma.done [#allocation5], 128
    $region41: #{tpu_custom_call.1} parent=1 // pred_fallthru
      _
    %214 = vsyncpa [#allocation4], 1
    %215 = vsyncpa [#allocation7], 1
    %216 = vsyncpa [#allocation5], 1

</llo_original>
